<compile_context>
chip_gen: v6e
topology: v6e:2x2x1
jax: 0.10.0
libtpu: 0.0.40
codegen_flags: <defaults>
</compile_context>

<pallas_src>
import functools

import jax
import jax.numpy as jnp
from jax.experimental import pallas as pl
from jax.experimental.pallas import tpu as pltpu

_MiB = 1024 * 1024


def _gelu_tanh(x):
    # torch.nn.functional.gelu(x, approximate="tanh")  (== "gelu_fast" path)
    c = 0.7978845608028654  # sqrt(2/pi)
    return 0.5 * x * (1.0 + jnp.tanh(c * (x + 0.044715 * x * x * x)))


def _mlp_kernel(x_ref, w1_ref, b1_ref, w2_ref, b2_ref, o_ref, acc_ref, *, act_dtype):
    # x_ref:  (tm, H)   w1_ref: (H, tn)   b1_ref: (1, tn)
    # w2_ref: (tn, H)   b2_ref: (1, H)    o_ref:  (tm, H)   acc_ref: (tm, H) f32
    n = pl.program_id(1)

    @pl.when(n == 0)
    def _init():
        acc_ref[...] = jnp.zeros_like(acc_ref)

    # dense_h_to_4h chunk: (tm, tn), MXU accumulates in f32.
    h = jnp.dot(x_ref[...], w1_ref[...], preferred_element_type=jnp.float32)
    h = (h + b1_ref[...].astype(jnp.float32)).astype(act_dtype)
    g = _gelu_tanh(h)

    # dense_4h_to_h partial sum over this I-chunk (feed MXU in weight dtype).
    acc_ref[...] += jnp.dot(
        g.astype(w2_ref.dtype), w2_ref[...], preferred_element_type=jnp.float32
    )

    @pl.when(n == pl.num_programs(1) - 1)
    def _finalize():
        o_ref[...] = (acc_ref[...] + b2_ref[...].astype(jnp.float32)).astype(o_ref.dtype)


def _tpu_info():
    """(device_kind_lowercase, vmem_capacity_bytes) with safe fallbacks."""
    kind = ""
    try:
        kind = jax.devices()[0].device_kind.lower()
    except Exception:
        pass
    cap = None
    try:
        cap = getattr(pltpu.get_tpu_info(), "vmem_capacity_bytes", None)
    except Exception:
        cap = None
    if not cap:
        if "v7" in kind:
            cap = 64 * _MiB
        elif "v5" in kind or "v6" in kind:
            cap = 128 * _MiB
        else:
            cap = 64 * _MiB  # conservative for unknown generations
    return kind, cap


def _choose(dim, target, multiples=(256, 128, 16, 8)):
    """Largest divisor of `dim` that is <= target and a multiple of one of
    `multiples` (larger alignments preferred, for full 256x256 MXU passes);
    falls back to the full extent, which is always a legal block shape."""
    dim = int(dim)
    target = max(1, min(int(target), dim))
    for m in multiples:
        start = (target // m) * m
        for cand in range(start, 0, -m):
            if dim % cand == 0:
                return cand
    return dim


def _auto_tiles(M, H, I, x_item, w_item, o_item, vmem_limit, tm_target, x_bufs):
    """VMEM-budget-driven (tm, tn): the f32 accumulator, x/out tiles, the
    double-buffered (H,tn)/(tn,H) weight chunks and the (tm,tn) activation
    temporaries must all fit inside vmem_limit."""
    tm = _choose(M, tm_target)
    tn_budget = 0
    for _ in range(4):
        fixed = tm * H * 4                      # f32 accumulator (scratch)
        fixed += x_bufs * tm * H * x_item       # x tile (1 or 2 buffers)
        fixed += 2 * tm * H * o_item            # out tile (double-buffered)
        fixed += 8 * H * 4                      # biases + slack
        remaining = vmem_limit - fixed
        per_tn = 4 * H * w_item + 3 * tm * 4    # w1+w2 (2 bufs each) + h/g temps
        tn_budget = remaining // per_tn if remaining > 0 else 0
        if tn_budget >= 256 or tn_budget >= I or tm <= 128:
            break
        tm = _choose(M, max(128, tm // 2))      # trade M-tile rows for lane chunk
    tn = _choose(I, min(max(tn_budget, 128), 1024))
    return tm, tn


@functools.partial(
    jax.jit,
    static_argnames=("tm", "tn", "vmem_limit_bytes", "act_dtype", "cast_to_bf16"),
)
def gpt_neox_mlp(hidden_states, w1, b1, w2, b2, *, tm=None, tn=None,
                 vmem_limit_bytes=None, act_dtype=None, cast_to_bf16=False):
    """hidden_states: (B, S, H); w1: (H, I); b1: (I,); w2: (I, H); b2: (H,).

    Weights are stored (in_features, out_features) (transposed vs torch) so
    the MXU sees plain row-major matmuls.  Accumulation is always f32.
    """
    B, S, H = hidden_states.shape
    I = w1.shape[1]
    M = B * S
    out_dtype = hidden_states.dtype

    if cast_to_bf16:
        # Opt-in: f32-fed MXU runs at a fraction of bf16 throughput.
        hidden_states = hidden_states.astype(jnp.bfloat16)
        w1 = w1.astype(jnp.bfloat16)
        b1 = b1.astype(jnp.bfloat16)
        w2 = w2.astype(jnp.bfloat16)
        b2 = b2.astype(jnp.bfloat16)

    kind, vmem_cap = _tpu_info()
    is_v5 = "v5" in kind
    is_v6 = "v6" in kind
    is_v7 = "v7" in kind

    if vmem_limit_bytes is None:
        if is_v7:
            vmem_limit_bytes = 52 * _MiB          # leave headroom on 64 MiB chips
        elif is_v6:
            vmem_limit_bytes = 104 * _MiB
        elif is_v5:
            vmem_limit_bytes = 96 * _MiB
        else:
            vmem_limit_bytes = min(int(vmem_cap * 0.8), 100 * _MiB)

    # Single-buffer the inner-grid-invariant blocks only on VMEM-scarce v7x.
    single_buffer_invariants = is_v7 and hasattr(pl, "Buffered")
    x_bufs = 1 if single_buffer_invariants else 2

    # Generation-aware weight-reuse targets (rows of x per streamed weight pass).
    if is_v6:
        tm_target = 1024      # clear the ~918 TF/s vs ~1.4 TB/s bf16 roofline
    else:
        tm_target = 512       # v5e compute-bound already; v7x is VMEM-scarce

    auto_tm, auto_tn = _auto_tiles(
        M, H, I,
        hidden_states.dtype.itemsize, w1.dtype.itemsize, out_dtype.itemsize,
        vmem_limit_bytes, tm_target, x_bufs,
    )
    if tm is None:
        tm = auto_tm
        # v7x: make sure the M axis can split across the 2 TensorCores.
        if is_v7 and M // tm < 2 and M >= 16:
            tm = _choose(M, M // 2)
    if tn is None:
        tn = auto_tn
    assert M % tm == 0 and I % tn == 0, (M, tm, I, tn)

    if act_dtype is None:
        # bf16 VPU/EUP exists on v6e/v7x; keep f32 on v5e / f32 inputs.
        use_bf16_act = (hidden_states.dtype == jnp.bfloat16) and not is_v5
        act_dtype = jnp.bfloat16 if use_bf16_act else jnp.float32

    x2d = hidden_states.reshape(M, H)
    b1_2d = b1.reshape(1, I)
    b2_2d = b2.reshape(1, H)

    n_m_tiles = M // tm
    bytes_accessed = (
        x2d.size * x2d.dtype.itemsize
        # weights (and biases) are re-streamed once per M tile
        + n_m_tiles * (w1.size * w1.dtype.itemsize + w2.size * w2.dtype.itemsize)
        + n_m_tiles * (b1.size * b1.dtype.itemsize + b2.size * b2.dtype.itemsize)
        + M * H * out_dtype.itemsize
    )
    cost = pl.CostEstimate(
        flops=4 * M * H * I,          # two matmuls
        transcendentals=M * I,        # tanh in the gelu
        bytes_accessed=bytes_accessed,
    )

    if single_buffer_invariants:
        x_spec = pl.BlockSpec((tm, H), lambda i, n: (i, 0),
                              pipeline_mode=pl.Buffered(1))
        b2_spec = pl.BlockSpec((1, H), lambda i, n: (0, 0),
                               pipeline_mode=pl.Buffered(1))
    else:
        x_spec = pl.BlockSpec((tm, H), lambda i, n: (i, 0))
        b2_spec = pl.BlockSpec((1, H), lambda i, n: (0, 0))

    out2d = pl.pallas_call(
        functools.partial(_mlp_kernel, act_dtype=act_dtype),
        out_shape=jax.ShapeDtypeStruct((M, H), out_dtype),
        grid_spec=pltpu.PrefetchScalarGridSpec(
            num_scalar_prefetch=0,
            grid=(n_m_tiles, I // tn),                        # (M tiles, I chunks)
            in_specs=[
                x_spec,                                       # x tile (tm, H)
                pl.BlockSpec((H, tn), lambda i, n: (0, n)),   # w1 chunk (cols)
                pl.BlockSpec((1, tn), lambda i, n: (0, n)),   # b1 chunk
                pl.BlockSpec((tn, H), lambda i, n: (n, 0)),   # w2 chunk (rows)
                b2_spec,                                      # b2 (finalize only)
            ],
            out_specs=pl.BlockSpec((tm, H), lambda i, n: (i, 0)),
            scratch_shapes=[pltpu.VMEM((tm, H), jnp.float32)],  # f32 accumulator
        ),
        compiler_params=pltpu.CompilerParams(
            dimension_semantics=("parallel", "arbitrary"),
            vmem_limit_bytes=vmem_limit_bytes,
        ),
        cost_estimate=cost,
    )(x2d, w1, b1_2d, w2, b2_2d)

    return out2d.reshape(B, S, H)


def _init_linear(key, fan_in, fan_out, dtype=jnp.float32):
    # nn.Linear default init: U(-1/sqrt(fan_in), 1/sqrt(fan_in))
    kw, kb = jax.random.split(key)
    bound = 1.0 / (fan_in ** 0.5)
    w = jax.random.uniform(kw, (fan_in, fan_out), dtype, -bound, bound)
    b = jax.random.uniform(kb, (fan_out,), dtype, -bound, bound)
    return w, b


def _reference(hidden_states, w1, b1, w2, b2):
    h = (hidden_states.astype(jnp.float32) @ w1.astype(jnp.float32)
         + b1.astype(jnp.float32))
    h = _gelu_tanh(h)
    return h @ w2.astype(jnp.float32) + b2.astype(jnp.float32)


if __name__ == "__main__":
    # Small GPTNeoX-like config (lane-dense: H and I multiples of 128).
    batch, seq, hidden, intermediate = 2, 64, 128, 512

    key = jax.random.PRNGKey(0)
    kx, k1, k2 = jax.random.split(key, 3)

    x = jax.random.normal(kx, (batch, seq, hidden), jnp.float32)
    w1, b1 = _init_linear(k1, hidden, intermediate)       # dense_h_to_4h
    w2, b2 = _init_linear(k2, intermediate, hidden)       # dense_4h_to_h

    ref = _reference(x, w1, b1, w2, b2)

    # Explicit small tiles so the (M-tile x I-chunk) grid and the accumulator
    # init/finalize branches are actually exercised (grid = (2, 2)).
    out = gpt_neox_mlp(x, w1, b1, w2, b2, tm=64, tn=256)
    out = jax.block_until_ready(out)
    assert out.shape == (batch, seq, hidden)
    assert jnp.allclose(out, ref, atol=1e-5, rtol=1e-5), "f32 mismatch vs reference"

    # Auto (generation-aware) tile-selection path.
    out_auto = jax.block_until_ready(gpt_neox_mlp(x, w1, b1, w2, b2))
    assert jnp.allclose(out_auto, ref, atol=1e-5, rtol=1e-5), "auto-tile mismatch"

    # bf16 MXU-feed path (f32 accumulation; bf16 gelu on v6e/v7x), looser tol.
    out_bf16 = gpt_neox_mlp(
        x.astype(jnp.bfloat16),
        w1.astype(jnp.bfloat16), b1.astype(jnp.bfloat16),
        w2.astype(jnp.bfloat16), b2.astype(jnp.bfloat16),
        tm=64, tn=256,
    )
    out_bf16 = jax.block_until_ready(out_bf16)
    assert jnp.allclose(out_bf16.astype(jnp.float32), ref, atol=5e-2, rtol=5e-2), \
        "bf16 mismatch vs reference"

    print("KERNEL_OK")
</pallas_src>

<mosaic_0001>
module attributes {stable_mosaic.version = 11 : i64} {
  func.func @_mlp_kernel(%arg0: i32, %arg1: i32, %arg2: memref<64x128xf32, #tpu.memory_space<vmem>>, %arg3: memref<128x256xf32, #tpu.memory_space<vmem>>, %arg4: memref<1x256xf32, #tpu.memory_space<vmem>>, %arg5: memref<256x128xf32, #tpu.memory_space<vmem>>, %arg6: memref<1x128xf32, #tpu.memory_space<vmem>>, %arg7: memref<64x128xf32, #tpu.memory_space<vmem>>, %arg8: memref<64x128xf32, #tpu.memory_space<vmem>>) attributes {dimension_semantics = [#tpu.dimension_semantics<parallel>, #tpu.dimension_semantics<arbitrary>], iteration_bounds = array<i64: 2, 2>, scalar_prefetch = 0 : i64, scratch_operands = 1 : i64, tpu.core_type = #tpu.core_type<tc>, window_params = [{transform_indices = @transform_0, window_bounds = array<i64: 64, 128>}, {transform_indices = @transform_1, window_bounds = array<i64: 128, 256>}, {transform_indices = @transform_2, window_bounds = array<i64: 1, 256>}, {transform_indices = @transform_3, window_bounds = array<i64: 256, 128>}, {pipeline_mode = #tpu.pipeline_mode<synchronous>, transform_indices = @transform_4, window_bounds = array<i64: 1, 128>}, {transform_indices = @transform_5, window_bounds = array<i64: 64, 128>}]} {
    %c0_i32 = arith.constant 0 : i32
    %0 = arith.cmpi eq, %arg1, %c0_i32 : i32
    %1 = arith.extui %0 : i1 to i32
    %c0_i32_0 = arith.constant 0 : i32
    %2 = arith.cmpi ne, %1, %c0_i32_0 : i32
    scf.if %2 {
      %cst_18 = arith.constant 0.000000e+00 : f32
      %30 = vector.broadcast %cst_18 : f32 to vector<64x128xf32>
      %c0_19 = arith.constant 0 : index
      %c0_20 = arith.constant 0 : index
      %31 = vector.load %arg8[%c0_19, %c0_20] : memref<64x128xf32, #tpu.memory_space<vmem>>, vector<64x128xf32>
      tpu.vector_store %arg8[%c0_19, %c0_20], %30 {strides = array<i32>} : memref<64x128xf32, #tpu.memory_space<vmem>>, vector<64x128xf32>,
    } else {
    }
    %c0 = arith.constant 0 : index
    %c0_1 = arith.constant 0 : index
    %3 = vector.load %arg2[%c0, %c0_1] : memref<64x128xf32, #tpu.memory_space<vmem>>, vector<64x128xf32>
    %c0_2 = arith.constant 0 : index
    %c0_3 = arith.constant 0 : index
    %4 = vector.load %arg3[%c0_2, %c0_3] : memref<128x256xf32, #tpu.memory_space<vmem>>, vector<128x256xf32>
    %cst = arith.constant dense<0.000000e+00> : vector<64x256xf32>
    %5 = tpu.matmul %3, %4, %cst {dimension_numbers = #tpu.dot_dimension_numbers<[1], [0], [0], [1], [0, 0, 1, 1], [], []>} : vector<64x128xf32>, vector<128x256xf32>, vector<64x256xf32> -> vector<64x256xf32>
    %c0_4 = arith.constant 0 : index
    %c0_5 = arith.constant 0 : index
    %6 = vector.load %arg4[%c0_4, %c0_5] : memref<1x256xf32, #tpu.memory_space<vmem>>, vector<1x256xf32>
    %7 = vector.broadcast %6 : vector<1x256xf32> to vector<64x256xf32>
    %8 = arith.addf %5, %7 : vector<64x256xf32>
    %cst_6 = arith.constant 5.000000e-01 : f32
    %9 = vector.broadcast %cst_6 : f32 to vector<64x256xf32>
    %10 = arith.mulf %9, %8 : vector<64x256xf32>
    %cst_7 = arith.constant 4.471500e-02 : f32
    %11 = vector.broadcast %cst_7 : f32 to vector<64x256xf32>
    %12 = arith.mulf %11, %8 : vector<64x256xf32>
    %13 = arith.mulf %12, %8 : vector<64x256xf32>
    %14 = arith.mulf %13, %8 : vector<64x256xf32>
    %15 = arith.addf %8, %14 : vector<64x256xf32>
    %cst_8 = arith.constant 0.797884583 : f32
    %16 = vector.broadcast %cst_8 : f32 to vector<64x256xf32>
    %17 = arith.mulf %16, %15 : vector<64x256xf32>
    %18 = math.tanh %17 : vector<64x256xf32>
    %cst_9 = arith.constant 1.000000e+00 : f32
    %19 = vector.broadcast %cst_9 : f32 to vector<64x256xf32>
    %20 = arith.addf %19, %18 : vector<64x256xf32>
    %21 = arith.mulf %10, %20 : vector<64x256xf32>
    %c0_10 = arith.constant 0 : index
    %c0_11 = arith.constant 0 : index
    %22 = vector.load %arg8[%c0_10, %c0_11] : memref<64x128xf32, #tpu.memory_space<vmem>>, vector<64x128xf32>
    %c0_12 = arith.constant 0 : index
    %c0_13 = arith.constant 0 : index
    %23 = vector.load %arg5[%c0_12, %c0_13] : memref<256x128xf32, #tpu.memory_space<vmem>>, vector<256x128xf32>
    %cst_14 = arith.constant dense<0.000000e+00> : vector<64x128xf32>
    %24 = tpu.matmul %21, %23, %cst_14 {dimension_numbers = #tpu.dot_dimension_numbers<[1], [0], [0], [1], [0, 0, 1, 1], [], []>} : vector<64x256xf32>, vector<256x128xf32>, vector<64x128xf32> -> vector<64x128xf32>
    %25 = arith.addf %22, %24 : vector<64x128xf32>
    %c0_15 = arith.constant 0 : index
    %c0_16 = arith.constant 0 : index
    %26 = vector.load %arg8[%c0_15, %c0_16] : memref<64x128xf32, #tpu.memory_space<vmem>>, vector<64x128xf32>
    tpu.vector_store %arg8[%c0_15, %c0_16], %25 {strides = array<i32>} : memref<64x128xf32, #tpu.memory_space<vmem>>, vector<64x128xf32>,
    %c1_i32 = arith.constant 1 : i32
    %27 = arith.cmpi eq, %arg1, %c1_i32 : i32
    %28 = arith.extui %27 : i1 to i32
    %c0_i32_17 = arith.constant 0 : i32
    %29 = arith.cmpi ne, %28, %c0_i32_17 : i32
    scf.if %29 {
      %c0_18 = arith.constant 0 : index
      %c0_19 = arith.constant 0 : index
      %30 = vector.load %arg8[%c0_18, %c0_19] : memref<64x128xf32, #tpu.memory_space<vmem>>, vector<64x128xf32>
      %c0_20 = arith.constant 0 : index
      %c0_21 = arith.constant 0 : index
      %31 = vector.load %arg6[%c0_20, %c0_21] : memref<1x128xf32, #tpu.memory_space<vmem>>, vector<1x128xf32>
      %32 = vector.broadcast %31 : vector<1x128xf32> to vector<64x128xf32>
      %33 = arith.addf %30, %32 : vector<64x128xf32>
      %c0_22 = arith.constant 0 : index
      %c0_23 = arith.constant 0 : index
      %34 = vector.load %arg7[%c0_22, %c0_23] : memref<64x128xf32, #tpu.memory_space<vmem>>, vector<64x128xf32>
      tpu.vector_store %arg7[%c0_22, %c0_23], %33 {strides = array<i32>} : memref<64x128xf32, #tpu.memory_space<vmem>>, vector<64x128xf32>,
    } else {
    }
    return
  }
  func.func @transform_0(%arg0: i32, %arg1: i32) -> (i32, i32) {
    %c0_i32 = arith.constant 0 : i32
    %c0_i32_0 = arith.constant 0 : i32
    return %arg0, %c0_i32 : i32, i32
  }
  func.func @transform_1(%arg0: i32, %arg1: i32) -> (i32, i32) {
    %c0_i32 = arith.constant 0 : i32
    %c0_i32_0 = arith.constant 0 : i32
    return %c0_i32, %arg1 : i32, i32
  }
  func.func @transform_2(%arg0: i32, %arg1: i32) -> (i32, i32) {
    %c0_i32 = arith.constant 0 : i32
    %c0_i32_0 = arith.constant 0 : i32
    return %c0_i32, %arg1 : i32, i32
  }
  func.func @transform_3(%arg0: i32, %arg1: i32) -> (i32, i32) {
    %c0_i32 = arith.constant 0 : i32
    %c0_i32_0 = arith.constant 0 : i32
    return %arg1, %c0_i32 : i32, i32
  }
  func.func @transform_4(%arg0: i32, %arg1: i32) -> (i32, i32) {
    %c0_i32 = arith.constant 0 : i32
    %c0_i32_0 = arith.constant 0 : i32
    %c0_i32_1 = arith.constant 0 : i32
    return %c0_i32, %c0_i32_0 : i32, i32
  }
  func.func @transform_5(%arg0: i32, %arg1: i32) -> (i32, i32) {
    %c0_i32 = arith.constant 0 : i32
    %c0_i32_0 = arith.constant 0 : i32
    return %arg0, %c0_i32 : i32, i32
  }
}

</mosaic_0001>

<llo_original>
// kernel: gpt_neox_mlp.1
$region0: #{gpt_neox_mlp.1}
  #allocation0 [shape = 'u32[]', space=smem, size = 0x4, offset = 0x4, fixed_abs, tag = 'smem constant byte address 0x4 - core index']
  #allocation1 [shape = 'u32[144,128]{1,0:T(1,128)}', space=vmem, size = 0x12000, scoped, tag = 'internal scratch']
  #allocation2 [shape = 'f32[64,128]{1,0:T(8,128)}', space=vmem, size = 0x8000, scoped, tag = 'scratch operand']
  %s0 = inlined_call_operand.hbm [shape: f32[128,128], index: 0, kind: input, shape index: {}]
  %s1 = inlined_call_operand.hbm [shape: f32[128,512], index: 1, kind: input, shape index: {}]
  %s2 = inlined_call_operand.vmem [shape: f32[1,512], index: 2, kind: input, shape index: {}]
  %s3 = inlined_call_operand.hbm [shape: f32[512,128], index: 3, kind: input, shape index: {}]
  %s4 = inlined_call_operand.vmem [shape: f32[1,128], index: 4, kind: input, shape index: {}]
  %s5 = inlined_call_operand.hbm [shape: f32[128,128], index: 5, kind: output, shape index: {}]
  %s6 = sld [smem:[#allocation0]]
  $region73: #{gpt_neox_mlp.1} parent=0
    _
  %s8 = ssub.s32 1, %s6
  %s9 = scalar_select 0, %s8, %s6
  $region1: #{gpt_neox_mlp.1} parent=0
    #allocation3 [shape = 'u8[65536]{0}', space=vmem, size = 0x10000, scoped, tag = 'input window, operand 0']
    #allocation4 [shape = 's32[2]{0}', space=sflag, size = 0x8, scoped, tag = 'scoped memory for gpt_neox_mlp.1']
    #allocation5 [shape = 's32[2]{0}', space=sflag, size = 0x8, scoped, tag = 'scoped memory for gpt_neox_mlp.1']
    #allocation6 [shape = 'u8[262144]{0}', space=vmem, size = 0x40000, scoped, tag = 'input window, operand 1']
    #allocation7 [shape = 's32[2]{0}', space=sflag, size = 0x8, scoped, tag = 'scoped memory for gpt_neox_mlp.1']
    #allocation8 [shape = 'u8[262144]{0}', space=vmem, size = 0x40000, scoped, tag = 'input window, operand 3']
    #allocation9 [shape = 'u8[65536]{0}', space=vmem, size = 0x10000, scoped, tag = 'output window, operand 0']
    %10 = vsyncpa [#allocation4], 0
    %s11 = scalar_lea.sflag [#allocation4], 1
    %12 = vsyncpa %s11, 0
    %13 = vsyncpa [#allocation7], 0
    %s14 = scalar_lea.sflag [#allocation7], 1
    %15 = vsyncpa %s14, 0
    %16 = vsyncpa [#allocation5], 0
    %s17 = scalar_lea.sflag [#allocation5], 1
    %18 = vsyncpa %s17, 0
    loop: start=0, step=1, limit=6
    $region2: #{gpt_neox_mlp.1} parent=1 // loop_pre_header
      _
    $region3: #{gpt_neox_mlp.1} parent=1 // loop_header
      %s20 = sphi 0, %s24
      %p21 = scmp.ge.s32.totalorder %s20, 6
      %s27 = sphi 0, %s39
      %s28 = sphi 0, %s35
      %s29 = sphi 0, %s27
      %s30 = sphi 0, %s28
      %s31 = sphi 0, %s29
      %s32 = sphi 0, %s30
      %s42 = sphi 0, %s44
      %s45 = sphi 0, %s42
      %s46 = sphi 0, %s45
      %s62 = sphi 0, %s46
      %s68 = sphi 0, %s70
      %s71 = sphi 0, %s68
      %s72 = sphi 0, %s71
      %s88 = sphi 0, %s72
      %s94 = sphi 0, %s96
      %s97 = sphi 0, %s94
      %s98 = sphi 0, %s97
      %s114 = sphi 0, %s98
      %s120 = sphi 0, %s122
      %s123 = sphi 0, %s120
      %s124 = sphi 0, %s123
      %s140 = sphi 0, %s124
      %s144 = sphi 0, %s144
      %s146 = sphi 0, %s144
      %s147 = sphi 0, %s146
      %s161 = sphi 0, %s147
      %s167 = sphi 0, %s169
      %s170 = sphi 0, %s167
      %s171 = sphi 0, %s170
      %s187 = sphi 0, %s171
    $region4: #{gpt_neox_mlp.1} parent=1 // loop_header_branch
      %23 = sbr.rel (%p21) target = $region8
    $region5: #{gpt_neox_mlp.1} parent=1 // loop_body
      %s25 = ssub.s32 %s20, 1
      %s26 = ssub.s32 %s20, 2
      %s33 = sadd.s32 1, %s28
      %p34 = scmp.ge.s32.totalorder %s33, 2
      %s35 = scalar_select %p34, 0, %s33
      %s36 = sadd.s32 1, %s27
      %s37 = scalar_select %p34, %s36, %s27
      %p38 = scmp.ge.s32.totalorder %s37, 2
      %s39 = scalar_select %p38, 0, %s37
      %s40 = ssub.s32 %s27, %s39
      %p41 = scmp.eq.s32.totalorder %s40, 0
      %s43 = sadd.s32 %s42, 1
      %s44 = scalar_select %p41, %s42, %s43
      %p47 = pneg %p41
      %p48 = scmp.eq.s32.totalorder %s20, 3
      %p49 = por %p47, %p48
      %p50 = scmp.ne.s32.totalorder %s42, %s45
      %p51 = scmp.eq.s32.totalorder %s20, 0
      %p52 = por %p50, %p51
      %p53 = scmp.ne.s32.totalorder %s42, %s45
      %p54 = scmp.eq.s32.totalorder %s25, 3
      %p55 = por %p53, %p54
      %p56 = scmp.ne.s32.totalorder %s45, %s46
      %p57 = scmp.eq.s32.totalorder %s25, 0
      %p58 = por %p56, %p57
      %p59 = scmp.ne.s32.totalorder %s45, %s46
      %p60 = scmp.eq.s32.totalorder %s26, 3
      %p61 = por %p59, %p60
      %p63 = scmp.ne.s32.totalorder %s46, %s62
      %p64 = scmp.eq.s32.totalorder %s26, 0
      %p65 = por %p63, %p64
      %s66 = ssub.s32 %s28, %s35
      %p67 = scmp.eq.s32.totalorder %s66, 0
      %s69 = sadd.s32 %s68, 1
      %s70 = scalar_select %p67, %s68, %s69
      %p73 = pneg %p67
      %p74 = scmp.eq.s32.totalorder %s20, 3
      %p75 = por %p73, %p74
      %p76 = scmp.ne.s32.totalorder %s68, %s71
      %p77 = scmp.eq.s32.totalorder %s20, 0
      %p78 = por %p76, %p77
      %p79 = scmp.ne.s32.totalorder %s68, %s71
      %p80 = scmp.eq.s32.totalorder %s25, 3
      %p81 = por %p79, %p80
      %p82 = scmp.ne.s32.totalorder %s71, %s72
      %p83 = scmp.eq.s32.totalorder %s25, 0
      %p84 = por %p82, %p83
      %p85 = scmp.ne.s32.totalorder %s71, %s72
      %p86 = scmp.eq.s32.totalorder %s26, 3
      %p87 = por %p85, %p86
      %p89 = scmp.ne.s32.totalorder %s72, %s88
      %p90 = scmp.eq.s32.totalorder %s26, 0
      %p91 = por %p89, %p90
      %s92 = ssub.s32 %s28, %s35
      %p93 = scmp.eq.s32.totalorder %s92, 0
      %s95 = sadd.s32 %s94, 1
      %s96 = scalar_select %p93, %s94, %s95
      %p99 = pneg %p93
      %p100 = scmp.eq.s32.totalorder %s20, 3
      %p101 = por %p99, %p100
      %p102 = scmp.ne.s32.totalorder %s94, %s97
      %p103 = scmp.eq.s32.totalorder %s20, 0
      %p104 = por %p102, %p103
      %p105 = scmp.ne.s32.totalorder %s94, %s97
      %p106 = scmp.eq.s32.totalorder %s25, 3
      %p107 = por %p105, %p106
      %p108 = scmp.ne.s32.totalorder %s97, %s98
      %p109 = scmp.eq.s32.totalorder %s25, 0
      %p110 = por %p108, %p109
      %p111 = scmp.ne.s32.totalorder %s97, %s98
      %p112 = scmp.eq.s32.totalorder %s26, 3
      %p113 = por %p111, %p112
      %p115 = scmp.ne.s32.totalorder %s98, %s114
      %p116 = scmp.eq.s32.totalorder %s26, 0
      %p117 = por %p115, %p116
      %s118 = ssub.s32 %s28, %s35
      %p119 = scmp.eq.s32.totalorder %s118, 0
      %s121 = sadd.s32 %s120, 1
      %s122 = scalar_select %p119, %s120, %s121
      %p125 = pneg %p119
      %p126 = scmp.eq.s32.totalorder %s20, 3
      %p127 = por %p125, %p126
      %p128 = scmp.ne.s32.totalorder %s120, %s123
      %p129 = scmp.eq.s32.totalorder %s20, 0
      %p130 = por %p128, %p129
      %p131 = scmp.ne.s32.totalorder %s120, %s123
      %p132 = scmp.eq.s32.totalorder %s25, 3
      %p133 = por %p131, %p132
      %p134 = scmp.ne.s32.totalorder %s123, %s124
      %p135 = scmp.eq.s32.totalorder %s25, 0
      %p136 = por %p134, %p135
      %p137 = scmp.ne.s32.totalorder %s123, %s124
      %p138 = scmp.eq.s32.totalorder %s26, 3
      %p139 = por %p137, %p138
      %p141 = scmp.ne.s32.totalorder %s124, %s140
      %p142 = scmp.eq.s32.totalorder %s26, 0
      %p143 = por %p141, %p142
      %s145 = sadd.s32 %s144, 1
      %p148 = scmp.eq.s32.totalorder %s20, 3
      %p149 = scmp.ne.s32.totalorder %s144, %s146
      %p150 = scmp.eq.s32.totalorder %s20, 0
      %p151 = por %p149, %p150
      %p152 = scmp.ne.s32.totalorder %s144, %s146
      %p153 = scmp.eq.s32.totalorder %s25, 3
      %p154 = por %p152, %p153
      %p155 = scmp.ne.s32.totalorder %s146, %s147
      %p156 = scmp.eq.s32.totalorder %s25, 0
      %p157 = por %p155, %p156
      %p158 = scmp.ne.s32.totalorder %s146, %s147
      %p159 = scmp.eq.s32.totalorder %s26, 3
      %p160 = por %p158, %p159
      %p162 = scmp.ne.s32.totalorder %s147, %s161
      %p163 = scmp.eq.s32.totalorder %s26, 0
      %p164 = por %p162, %p163
      %s165 = ssub.s32 %s27, %s39
      %p166 = scmp.eq.s32.totalorder %s165, 0
      %s168 = sadd.s32 %s167, 1
      %s169 = scalar_select %p166, %s167, %s168
      %p172 = pneg %p166
      %p173 = scmp.eq.s32.totalorder %s20, 3
      %p174 = por %p172, %p173
      %p175 = scmp.ne.s32.totalorder %s167, %s170
      %p176 = scmp.eq.s32.totalorder %s20, 0
      %p177 = por %p175, %p176
      %p178 = scmp.ne.s32.totalorder %s167, %s170
      %p179 = scmp.eq.s32.totalorder %s25, 3
      %p180 = por %p178, %p179
      %p181 = scmp.ne.s32.totalorder %s170, %s171
      %p182 = scmp.eq.s32.totalorder %s25, 0
      %p183 = por %p181, %p182
      %p184 = scmp.ne.s32.totalorder %s170, %s171
      %p185 = scmp.eq.s32.totalorder %s26, 3
      %p186 = por %p184, %p185
      %p188 = scmp.ne.s32.totalorder %s171, %s187
      %p189 = scmp.eq.s32.totalorder %s26, 0
      %p190 = por %p188, %p189
      %p191 = scmp.le.s32.totalorder 1, %s20
      %p192 = scmp.lt.s32.totalorder %s20, 5
      %p193 = pnand %p191, %p192
      %p194 = pneg %p193
      // Predicated region
      $region9: #{gpt_neox_mlp.1} parent=5 // pred_check
        _
      $region10: #{gpt_neox_mlp.1} parent=5 // pred_check_branch
        %196 = sbr.rel (%p193) target = $region12
      $region11: #{gpt_neox_mlp.1} parent=5 // pred_region
        %s197 = ssub.s32 %s20, 1
        // Predicated region
        $region13: #{gpt_neox_mlp.1} parent=11 // pred_check
          %p198 = pneg %p157
        $region14: #{gpt_neox_mlp.1} parent=11 // pred_check_branch
          %200 = sbr.rel (%p198) target = $region16
        $region15: #{gpt_neox_mlp.1} parent=11 // pred_region
          _
        $region16: #{gpt_neox_mlp.1} parent=11 // pred_fallthru
          _
      $region12: #{gpt_neox_mlp.1} parent=5 // pred_fallthru
        _
      %p201 = scmp.lt.s32.totalorder %s20, 4
      // Predicated region
      $region17: #{gpt_neox_mlp.1} parent=5 // pred_check
        %p202 = pneg %p201
      $region18: #{gpt_neox_mlp.1} parent=5 // pred_check_branch
        %204 = sbr.rel (%p202) target = $region20
      $region19: #{gpt_neox_mlp.1} parent=5 // pred_region
        // Predicated region
        $region21: #{gpt_neox_mlp.1} parent=19 // pred_check
          %p205 = pneg %p52
        $region22: #{gpt_neox_mlp.1} parent=19 // pred_check_branch
          %207 = sbr.rel (%p205) target = $region24
        $region23: #{gpt_neox_mlp.1} parent=19 // pred_region
          %s208 = sand.u32 %s42, 1
          %s209 = scalar_lea.sflag [#allocation4], %s208
          %s210 = sand.u32 %s42, 1
          %s211 = smul.addr %s210, 64
          %s212 = scalar_lea.vmem [#allocation3], %s211
          %s213 = smul.u32 8, %s27
          %s215 = ssub.s32 1024, 1024
          %216 = vsyncadd %s209, %s215
          %s217 = smul.addr %s213, 128
          %s218 = scalar_lea.hbm %s0, %s217
          %s219 = sshll.u32 %s212, 4
          %s220 = int_to_ptr.vmem [resolvable:$true] %s219
          %225 = dma.hbm_to_vmem [thread:$0]  %s218, 1024, %s220, %s209, 128, 128, 8
        $region24: #{gpt_neox_mlp.1} parent=19 // pred_fallthru
          _
        // Predicated region
        $region25: #{gpt_neox_mlp.1} parent=19 // pred_check
          %p226 = pneg %p78
        $region26: #{gpt_neox_mlp.1} parent=19 // pred_check_branch
          %228 = sbr.rel (%p226) target = $region28
        $region27: #{gpt_neox_mlp.1} parent=19 // pred_region
          %s229 = sand.u32 %s20, 1
          %s230 = scalar_lea.sflag [#allocation7], %s229
          %s231 = sand.u32 %s68, 1
          %s232 = smul.addr %s231, 256
          %s233 = scalar_lea.vmem [#allocation6], %s232
          %s234 = smul.u32 2, %s28
          %s236 = ssub.s32 4096, 4096
          %237 = vsyncadd %s230, %s236
          %s238 = smul.addr %s234, 128
          %s239 = scalar_lea.hbm %s1, %s238
          %s240 = sshll.u32 %s233, 4
          %s241 = int_to_ptr.vmem [resolvable:$true] %s240
          %246 = dma.hbm_to_vmem [thread:$0]  %s239, 4096, %s241, %s230, 512, 256, 16
        $region28: #{gpt_neox_mlp.1} parent=19 // pred_fallthru
          _
        // Predicated region
        $region29: #{gpt_neox_mlp.1} parent=19 // pred_check
          %p247 = pneg %p104
        $region30: #{gpt_neox_mlp.1} parent=19 // pred_check_branch
          %249 = sbr.rel (%p247) target = $region32
        $region31: #{gpt_neox_mlp.1} parent=19 // pred_region
          %s250 = smul.u32 2, %s28
          %p251 = scmp.lt.s32.totalorder %s250, 3
          %s252 = scalar_select %p251, %s250, 3
          %s253 = scalar_lea.vmem %s2, %s252
          %s254 = smul.u32 2, %s28
        $region32: #{gpt_neox_mlp.1} parent=19 // pred_fallthru
          _
        // Predicated region
        $region33: #{gpt_neox_mlp.1} parent=19 // pred_check
          %p255 = pneg %p130
        $region34: #{gpt_neox_mlp.1} parent=19 // pred_check_branch
          %257 = sbr.rel (%p255) target = $region36
        $region35: #{gpt_neox_mlp.1} parent=19 // pred_region
          %s258 = sand.u32 %s20, 1
          %s259 = scalar_lea.sflag [#allocation7], %s258
          %s260 = sand.u32 %s120, 1
          %s261 = smul.addr %s260, 256
          %s262 = scalar_lea.vmem [#allocation8], %s261
          %s263 = smul.u32 32, %s28
          %s265 = ssub.s32 4096, 4096
          %266 = vsyncadd %s259, %s265
          %s267 = smul.addr %s263, 128
          %s268 = scalar_lea.hbm %s3, %s267
          %s269 = sshll.u32 %s262, 4
          %s270 = int_to_ptr.vmem [resolvable:$true] %s269
          %275 = dma.hbm_to_vmem [thread:$0]  %s268, 4096, %s270, %s259, 128, 128, 8
        $region36: #{gpt_neox_mlp.1} parent=19 // pred_fallthru
          _
      $region20: #{gpt_neox_mlp.1} parent=5 // pred_fallthru
        _
      %p276 = scmp.le.s32.totalorder 1, %s20
      %p277 = scmp.lt.s32.totalorder %s20, 5
      %p278 = pnand %p276, %p277
      %p279 = pneg %p278
      // Predicated region
      $region37: #{gpt_neox_mlp.1} parent=5 // pred_check
        _
      $region38: #{gpt_neox_mlp.1} parent=5 // pred_check_branch
        %281 = sbr.rel (%p278) target = $region40
      $region39: #{gpt_neox_mlp.1} parent=5 // pred_region
        %s282 = ssub.s32 %s20, 1
        %s283 = sand.u32 %s45, 1
        %s284 = scalar_lea.sflag [#allocation4], %s283
        %s285 = sand.u32 %s45, 1
        %s286 = smul.addr %s285, 64
        %s287 = scalar_lea.vmem [#allocation3], %s286
        // Predicated region
        $region41: #{gpt_neox_mlp.1} parent=39 // pred_check
          %p288 = pneg %p58
        $region42: #{gpt_neox_mlp.1} parent=39 // pred_check_branch
          %290 = sbr.rel (%p288) target = $region44
        $region43: #{gpt_neox_mlp.1} parent=39 // pred_region
          %291 = dma.done %s284, 1024
        $region44: #{gpt_neox_mlp.1} parent=39 // pred_fallthru
          _
        %s292 = sand.u32 %s25, 1
        %s293 = scalar_lea.sflag [#allocation7], %s292
        %s294 = sand.u32 %s71, 1
        %s295 = smul.addr %s294, 256
        %s296 = scalar_lea.vmem [#allocation6], %s295
        // Predicated region
        $region45: #{gpt_neox_mlp.1} parent=39 // pred_check
          %p297 = pneg %p84
        $region46: #{gpt_neox_mlp.1} parent=39 // pred_check_branch
          %299 = sbr.rel (%p297) target = $region48
        $region47: #{gpt_neox_mlp.1} parent=39 // pred_region
          %300 = dma.done %s293, 4096
        $region48: #{gpt_neox_mlp.1} parent=39 // pred_fallthru
          _
        %s301 = sand.u32 %s25, 1
        %s302 = scalar_lea.sflag [#allocation7], %s301
        %s303 = sand.u32 %s123, 1
        %s304 = smul.addr %s303, 256
        %s305 = scalar_lea.vmem [#allocation8], %s304
        // Predicated region
        $region49: #{gpt_neox_mlp.1} parent=39 // pred_check
          %p306 = pneg %p136
        $region50: #{gpt_neox_mlp.1} parent=39 // pred_check_branch
          %308 = sbr.rel (%p306) target = $region52
        $region51: #{gpt_neox_mlp.1} parent=39 // pred_region
          %309 = dma.done %s302, 4096
        $region52: #{gpt_neox_mlp.1} parent=39 // pred_fallthru
          _
        %s310 = sand.u32 %s45, 1
        %s311 = scalar_lea.sflag [#allocation4], %s310
        %s312 = sand.u32 %s45, 1
        %s313 = smul.addr %s312, 64
        %s314 = scalar_lea.vmem [#allocation3], %s313
        %p315 = pneg %p58
        %p316 = pneg %p55
        %s317 = sand.u32 %s25, 1
        %s318 = scalar_lea.sflag [#allocation7], %s317
        %s319 = sand.u32 %s71, 1
        %s320 = smul.addr %s319, 256
        %s321 = scalar_lea.vmem [#allocation6], %s320
        %p322 = pneg %p84
        %p323 = pneg %p81
        %s324 = smul.u32 2, %s30
        %p325 = scmp.lt.s32.totalorder %s324, 3
        %s326 = scalar_select %p325, %s324, 3
        %s327 = scalar_lea.vmem %s2, %s326
        %p328 = pneg %p110
        %p329 = pneg %p107
        %s330 = sand.u32 %s25, 1
        %s331 = scalar_lea.sflag [#allocation7], %s330
        %s332 = sand.u32 %s123, 1
        %s333 = smul.addr %s332, 256
        %s334 = scalar_lea.vmem [#allocation8], %s333
        %p335 = pneg %p136
        %p336 = pneg %p133
        %p337 = pneg %p157
        %p338 = pneg %p154
        %p339 = pneg %p183
        %p340 = pneg %p180
        %s341 = sand.u32 %s170, 1
        %s342 = scalar_lea.sflag [#allocation5], %s341
        %s343 = sand.u32 %s170, 1
        %s344 = smul.addr %s343, 64
        %s345 = scalar_lea.vmem [#allocation9], %s344
        %s346 = smul.u32 8, %s29
        %s347 = smul.u32 2, %s30
        %s348 = smul.u32 2, %s30
        %p349 = scmp.lt.s32.totalorder %s348, 3
        %s350 = scalar_select %p349, %s348, 3
        %s351 = scalar_lea.vmem %s2, %s350
        %s352 = smul.u32 2, %s30
        %s353 = smul.u32 32, %s30
        %s354 = smul.u32 8, %s29
        %p355 = scmp.eq.s32.totalorder %s30, 0
        // Predicated region
        $region53: #{gpt_neox_mlp.1} parent=39 // pred_check
          %p356 = pneg %p355
        $region54: #{gpt_neox_mlp.1} parent=39 // pred_check_branch
          %358 = sbr.rel (%p356) target = $region56
        $region55: #{gpt_neox_mlp.1} parent=39 // pred_region
          %359 = vst [vmem:[#allocation2] sm:$0xff] 0.0
          %360 = vst [vmem:[#allocation2 + $0x8] sm:$0xff] 0.0
          %361 = vst [vmem:[#allocation2 + $0x10] sm:$0xff] 0.0
          %362 = vst [vmem:[#allocation2 + $0x18] sm:$0xff] 0.0
          %363 = vst [vmem:[#allocation2 + $0x20] sm:$0xff] 0.0
          %364 = vst [vmem:[#allocation2 + $0x28] sm:$0xff] 0.0
          %365 = vst [vmem:[#allocation2 + $0x30] sm:$0xff] 0.0
          %366 = vst [vmem:[#allocation2 + $0x38] sm:$0xff] 0.0
        $region56: #{gpt_neox_mlp.1} parent=39 // pred_fallthru
          _
        %v367 = vld [vmem:[%s287] sm:$0xff]
        %v368 = vld [vmem:[%s287 + $0x8] sm:$0xff]
        %v369 = vld [vmem:[%s287 + $0x10] sm:$0xff]
        %v370 = vld [vmem:[%s287 + $0x18] sm:$0xff]
        %v371 = vld [vmem:[%s287 + $0x20] sm:$0xff]
        %v372 = vld [vmem:[%s287 + $0x28] sm:$0xff]
        %v373 = vld [vmem:[%s287 + $0x30] sm:$0xff]
        %v374 = vld [vmem:[%s287 + $0x38] sm:$0xff]
        %v375 = vld [vmem:[%s296] sm:$0xff]
        %v376 = vld [vmem:[%s296 + $0x8] sm:$0xff]
        %v377 = vld [vmem:[%s296 + $0x10] sm:$0xff]
        %v378 = vld [vmem:[%s296 + $0x18] sm:$0xff]
        %v379 = vld [vmem:[%s296 + $0x20] sm:$0xff]
        %v380 = vld [vmem:[%s296 + $0x28] sm:$0xff]
        %v381 = vld [vmem:[%s296 + $0x30] sm:$0xff]
        %v382 = vld [vmem:[%s296 + $0x38] sm:$0xff]
        %v383 = vld [vmem:[%s296 + $0x40] sm:$0xff]
        %v384 = vld [vmem:[%s296 + $0x48] sm:$0xff]
        %v385 = vld [vmem:[%s296 + $0x50] sm:$0xff]
        %v386 = vld [vmem:[%s296 + $0x58] sm:$0xff]
        %v387 = vld [vmem:[%s296 + $0x60] sm:$0xff]
        %v388 = vld [vmem:[%s296 + $0x68] sm:$0xff]
        %v389 = vld [vmem:[%s296 + $0x70] sm:$0xff]
        %v390 = vld [vmem:[%s296 + $0x78] sm:$0xff]
        %v391 = vld [vmem:[%s296 + $0x80] sm:$0xff]
        %v392 = vld [vmem:[%s296 + $0x88] sm:$0xff]
        %v393 = vld [vmem:[%s296 + $0x90] sm:$0xff]
        %v394 = vld [vmem:[%s296 + $0x98] sm:$0xff]
        %v395 = vld [vmem:[%s296 + $0xa0] sm:$0xff]
        %v396 = vld [vmem:[%s296 + $0xa8] sm:$0xff]
        %v397 = vld [vmem:[%s296 + $0xb0] sm:$0xff]
        %v398 = vld [vmem:[%s296 + $0xb8] sm:$0xff]
        %v399 = vld [vmem:[%s296 + $0xc0] sm:$0xff]
        %v400 = vld [vmem:[%s296 + $0xc8] sm:$0xff]
        %v401 = vld [vmem:[%s296 + $0xd0] sm:$0xff]
        %v402 = vld [vmem:[%s296 + $0xd8] sm:$0xff]
        %v403 = vld [vmem:[%s296 + $0xe0] sm:$0xff]
        %v404 = vld [vmem:[%s296 + $0xe8] sm:$0xff]
        %v405 = vld [vmem:[%s296 + $0xf0] sm:$0xff]
        %v406 = vld [vmem:[%s296 + $0xf8] sm:$0xff]
        %v407 = vld [vmem:[%s351] sm:$0x3]
        %v409 = vlaneseq
        %v410 = vshrl.u32 %v409, 7
        %v411 = vsub.s32 0, %v410
        %v412 = vrot.slane %v407, %v411
        %v413 = vlaneseq
        %v414 = vshrl.u32 %v413, 7
        %v415 = vsub.s32 1, %v414
        %v416 = vrot.slane %v407, %v415
        %419 = vmatprep.subr.mxu0 %v406
        %420 = vmatpush1.msra.mxu0 %v405
        %421 = vmatprep.subr.mxu0 %v404
        %422 = vmatpush1.msra.mxu0 %v403
        %423 = vmatprep.subr.mxu0 %v402
        %424 = vmatpush1.msra.mxu0 %v401
        %425 = vmatprep.subr.mxu0 %v400
        %426 = vmatpush1.msra.mxu0 %v399
        %427 = vmatprep.subr.mxu0 %v398
        %428 = vmatpush1.msra.mxu0 %v397
        %429 = vmatprep.subr.mxu0 %v396
        %430 = vmatpush1.msra.mxu0 %v395
        %431 = vmatprep.subr.mxu0 %v394
        %432 = vmatpush1.msra.mxu0 %v393
        %433 = vmatprep.subr.mxu0 %v392
        %434 = vmatpush1.msra.mxu0 %v391
        %435 = vmatprep.subr.mxu0 %v390
        %436 = vmatpush1.msra.mxu0 %v389
        %437 = vmatprep.subr.mxu0 %v388
        %438 = vmatpush1.msra.mxu0 %v387
        %439 = vmatprep.subr.mxu0 %v386
        %440 = vmatpush1.msra.mxu0 %v385
        %441 = vmatprep.subr.mxu0 %v384
        %442 = vmatpush1.msra.mxu0 %v383
        %443 = vmatprep.subr.mxu0 %v382
        %444 = vmatpush1.msra.mxu0 %v381
        %445 = vmatprep.subr.mxu0 %v380
        %446 = vmatpush1.msra.mxu0 %v379
        %447 = vmatprep.subr.mxu0 %v378
        %448 = vmatpush1.msra.mxu0 %v377
        %449 = vmatprep.subr.mxu0 %v376
        %450 = vmatpush1.msra.mxu0 %v375
        %451 = vmatprep.subr.mxu0 0.0
        %452 = vmatpush2.msra.mxu0 0.0
        %453 = vmatprep.subr.mxu0 0.0
        %454 = vmatpush2.msra.mxu0 0.0
        %455 = vmatprep.subr.mxu0 0.0
        %456 = vmatpush2.msra.mxu0 0.0
        %457 = vmatprep.subr.mxu0 0.0
        %458 = vmatpush2.msra.mxu0 0.0
        %459 = vmatprep.subr.mxu0 0.0
        %460 = vmatpush2.msra.mxu0 0.0
        %461 = vmatprep.subr.mxu0 0.0
        %462 = vmatpush2.msra.mxu0 0.0
        %463 = vmatprep.subr.mxu0 0.0
        %464 = vmatpush2.msra.mxu0 0.0
        %465 = vmatprep.subr.mxu0 0.0
        %466 = vmatpush2.msra.mxu0 0.0
        %467 = vmatprep.subr.mxu0 0.0
        %468 = vmatpush2.msra.mxu0 0.0
        %469 = vmatprep.subr.mxu0 0.0
        %470 = vmatpush2.msra.mxu0 0.0
        %471 = vmatprep.subr.mxu0 0.0
        %472 = vmatpush2.msra.mxu0 0.0
        %473 = vmatprep.subr.mxu0 0.0
        %474 = vmatpush2.msra.mxu0 0.0
        %475 = vmatprep.subr.mxu0 0.0
        %476 = vmatpush2.msra.mxu0 0.0
        %477 = vmatprep.subr.mxu0 0.0
        %478 = vmatpush2.msra.mxu0 0.0
        %479 = vmatprep.subr.mxu0 0.0
        %480 = vmatpush2.msra.mxu0 0.0
        %481 = vmatprep.subr.mxu0 0.0
        %482 = vmatpush2.msra.mxu0 0.0
        %483 = vmatprep.mubr.f32.mxu0 0.0
        %484 = vmatmul.mubr.f32.gmra.mxu0 %v367
        %v485 = vpop.f32.mrf.mxu0
        %v486 = vadd.f32 %v412, %v485
        %v487 = vpop.f32.mrf.mxu0
        %v488 = vadd.f32 %v416, %v487
        %489 = vmatprep.mubr.f32.mxu0 0.0
        %490 = vmatmul.mubr.f32.gmra.mxu0 %v368
        %v491 = vpop.f32.mrf.mxu0
        %v492 = vadd.f32 %v412, %v491
        %v493 = vpop.f32.mrf.mxu0
        %v494 = vadd.f32 %v416, %v493
        %495 = vmatprep.mubr.f32.mxu0 0.0
        %496 = vmatmul.mubr.f32.gmra.mxu0 %v369
        %v497 = vpop.f32.mrf.mxu0
        %v498 = vadd.f32 %v412, %v497
        %v499 = vpop.f32.mrf.mxu0
        %v500 = vadd.f32 %v416, %v499
        %501 = vmatprep.mubr.f32.mxu0 0.0
        %502 = vmatmul.mubr.f32.gmra.mxu0 %v370
        %v503 = vpop.f32.mrf.mxu0
        %v504 = vadd.f32 %v412, %v503
        %v505 = vpop.f32.mrf.mxu0
        %v506 = vadd.f32 %v416, %v505
        %507 = vmatprep.mubr.f32.mxu0 0.0
        %508 = vmatmul.mubr.f32.gmra.mxu0 %v371
        %v509 = vpop.f32.mrf.mxu0
        %v510 = vadd.f32 %v412, %v509
        %v511 = vpop.f32.mrf.mxu0
        %v512 = vadd.f32 %v416, %v511
        %513 = vmatprep.mubr.f32.mxu0 0.0
        %514 = vmatmul.mubr.f32.gmra.mxu0 %v372
        %v515 = vpop.f32.mrf.mxu0
        %v516 = vadd.f32 %v412, %v515
        %v517 = vpop.f32.mrf.mxu0
        %v518 = vadd.f32 %v416, %v517
        %519 = vmatprep.mubr.f32.mxu0 0.0
        %520 = vmatmul.mubr.f32.gmra.mxu0 %v373
        %v521 = vpop.f32.mrf.mxu0
        %v522 = vadd.f32 %v412, %v521
        %v523 = vpop.f32.mrf.mxu0
        %v524 = vadd.f32 %v416, %v523
        %525 = vmatprep.mubr.f32.mxu0 0.0
        %526 = vmatmul.mubr.f32.gmra.mxu0 %v374
        %v527 = vpop.f32.mrf.mxu0
        %v528 = vadd.f32 %v412, %v527
        %v529 = vpop.f32.mrf.mxu0
        %v530 = vadd.f32 %v416, %v529
        %531 = vdwg.mxu0
        %v532 = vmul.f32 %v486, 0.5
        %v533 = vmul.f32 %v488, 0.5
        %v534 = vmul.f32 %v492, 0.5
        %v535 = vmul.f32 %v494, 0.5
        %v536 = vmul.f32 %v498, 0.5
        %v537 = vmul.f32 %v500, 0.5
        %v538 = vmul.f32 %v504, 0.5
        %v539 = vmul.f32 %v506, 0.5
        %v540 = vmul.f32 %v510, 0.5
        %v541 = vmul.f32 %v512, 0.5
        %v542 = vmul.f32 %v516, 0.5
        %v543 = vmul.f32 %v518, 0.5
        %v544 = vmul.f32 %v522, 0.5
        %v545 = vmul.f32 %v524, 0.5
        %v546 = vmul.f32 %v528, 0.5
        %v547 = vmul.f32 %v530, 0.5
        %v548 = vmul.f32 %v486, 0.044715
        %v549 = vmul.f32 %v488, 0.044715
        %v550 = vmul.f32 %v492, 0.044715
        %v551 = vmul.f32 %v494, 0.044715
        %v552 = vmul.f32 %v498, 0.044715
        %v553 = vmul.f32 %v500, 0.044715
        %v554 = vmul.f32 %v504, 0.044715
        %v555 = vmul.f32 %v506, 0.044715
        %v556 = vmul.f32 %v510, 0.044715
        %v557 = vmul.f32 %v512, 0.044715
        %v558 = vmul.f32 %v516, 0.044715
        %v559 = vmul.f32 %v518, 0.044715
        %v560 = vmul.f32 %v522, 0.044715
        %v561 = vmul.f32 %v524, 0.044715
        %v562 = vmul.f32 %v528, 0.044715
        %v563 = vmul.f32 %v530, 0.044715
        %v564 = vmul.f32 %v548, %v486
        %v565 = vmul.f32 %v549, %v488
        %v566 = vmul.f32 %v550, %v492
        %v567 = vmul.f32 %v551, %v494
        %v568 = vmul.f32 %v552, %v498
        %v569 = vmul.f32 %v553, %v500
        %v570 = vmul.f32 %v554, %v504
        %v571 = vmul.f32 %v555, %v506
        %v572 = vmul.f32 %v556, %v510
        %v573 = vmul.f32 %v557, %v512
        %v574 = vmul.f32 %v558, %v516
        %v575 = vmul.f32 %v559, %v518
        %v576 = vmul.f32 %v560, %v522
        %v577 = vmul.f32 %v561, %v524
        %v578 = vmul.f32 %v562, %v528
        %v579 = vmul.f32 %v563, %v530
        %v580 = vmul.f32 %v564, %v486
        %v581 = vmul.f32 %v565, %v488
        %v582 = vmul.f32 %v566, %v492
        %v583 = vmul.f32 %v567, %v494
        %v584 = vmul.f32 %v568, %v498
        %v585 = vmul.f32 %v569, %v500
        %v586 = vmul.f32 %v570, %v504
        %v587 = vmul.f32 %v571, %v506
        %v588 = vmul.f32 %v572, %v510
        %v589 = vmul.f32 %v573, %v512
        %v590 = vmul.f32 %v574, %v516
        %v591 = vmul.f32 %v575, %v518
        %v592 = vmul.f32 %v576, %v522
        %v593 = vmul.f32 %v577, %v524
        %v594 = vmul.f32 %v578, %v528
        %v595 = vmul.f32 %v579, %v530
        %v596 = vadd.f32 %v486, %v580
        %v597 = vadd.f32 %v488, %v581
        %v598 = vadd.f32 %v492, %v582
        %v599 = vadd.f32 %v494, %v583
        %v600 = vadd.f32 %v498, %v584
        %v601 = vadd.f32 %v500, %v585
        %v602 = vadd.f32 %v504, %v586
        %v603 = vadd.f32 %v506, %v587
        %v604 = vadd.f32 %v510, %v588
        %v605 = vadd.f32 %v512, %v589
        %v606 = vadd.f32 %v516, %v590
        %v607 = vadd.f32 %v518, %v591
        %v608 = vadd.f32 %v522, %v592
        %v609 = vadd.f32 %v524, %v593
        %v610 = vadd.f32 %v528, %v594
        %v611 = vadd.f32 %v530, %v595
        %v612 = vmul.f32 %v596, 0.7978846
        %v613 = vmul.f32 %v597, 0.7978846
        %v614 = vmul.f32 %v598, 0.7978846
        %v615 = vmul.f32 %v599, 0.7978846
        %v616 = vmul.f32 %v600, 0.7978846
        %v617 = vmul.f32 %v601, 0.7978846
        %v618 = vmul.f32 %v602, 0.7978846
        %v619 = vmul.f32 %v603, 0.7978846
        %v620 = vmul.f32 %v604, 0.7978846
        %v621 = vmul.f32 %v605, 0.7978846
        %v622 = vmul.f32 %v606, 0.7978846
        %v623 = vmul.f32 %v607, 0.7978846
        %v624 = vmul.f32 %v608, 0.7978846
        %v625 = vmul.f32 %v609, 0.7978846
        %v626 = vmul.f32 %v610, 0.7978846
        %v627 = vmul.f32 %v611, 0.7978846
        %v628 = vtanh.pop %v612
        %v629 = vtanh.pop %v613
        %v630 = vtanh.pop %v614
        %v631 = vtanh.pop %v615
        %v632 = vtanh.pop %v616
        %v633 = vtanh.pop %v617
        %v634 = vtanh.pop %v618
        %v635 = vtanh.pop %v619
        %v636 = vtanh.pop %v620
        %v637 = vtanh.pop %v621
        %v638 = vtanh.pop %v622
        %v639 = vtanh.pop %v623
        %v640 = vtanh.pop %v624
        %v641 = vtanh.pop %v625
        %v642 = vtanh.pop %v626
        %v643 = vtanh.pop %v627
        %v644 = vadd.f32 %v628, 1.0
        %v645 = vadd.f32 %v629, 1.0
        %v646 = vadd.f32 %v630, 1.0
        %v647 = vadd.f32 %v631, 1.0
        %v648 = vadd.f32 %v632, 1.0
        %v649 = vadd.f32 %v633, 1.0
        %v650 = vadd.f32 %v634, 1.0
        %v651 = vadd.f32 %v635, 1.0
        %v652 = vadd.f32 %v636, 1.0
        %v653 = vadd.f32 %v637, 1.0
        %v654 = vadd.f32 %v638, 1.0
        %v655 = vadd.f32 %v639, 1.0
        %v656 = vadd.f32 %v640, 1.0
        %v657 = vadd.f32 %v641, 1.0
        %v658 = vadd.f32 %v642, 1.0
        %v659 = vadd.f32 %v643, 1.0
        %v660 = vmul.f32 %v532, %v644
        %v661 = vmul.f32 %v533, %v645
        %v662 = vmul.f32 %v534, %v646
        %v663 = vmul.f32 %v535, %v647
        %v664 = vmul.f32 %v536, %v648
        %v665 = vmul.f32 %v537, %v649
        %v666 = vmul.f32 %v538, %v650
        %v667 = vmul.f32 %v539, %v651
        %v668 = vmul.f32 %v540, %v652
        %v669 = vmul.f32 %v541, %v653
        %v670 = vmul.f32 %v542, %v654
        %v671 = vmul.f32 %v543, %v655
        %v672 = vmul.f32 %v544, %v656
        %v673 = vmul.f32 %v545, %v657
        %v674 = vmul.f32 %v546, %v658
        %v675 = vmul.f32 %v547, %v659
        %v676 = vld [vmem:[#allocation2] sm:$0xff]
        %v677 = vld [vmem:[#allocation2 + $0x8] sm:$0xff]
        %v678 = vld [vmem:[#allocation2 + $0x10] sm:$0xff]
        %v679 = vld [vmem:[#allocation2 + $0x18] sm:$0xff]
        %v680 = vld [vmem:[#allocation2 + $0x20] sm:$0xff]
        %v681 = vld [vmem:[#allocation2 + $0x28] sm:$0xff]
        %v682 = vld [vmem:[#allocation2 + $0x30] sm:$0xff]
        %v683 = vld [vmem:[#allocation2 + $0x38] sm:$0xff]
        %v684 = vld [vmem:[%s305] sm:$0xff]
        %v685 = vld [vmem:[%s305 + $0x8] sm:$0xff]
        %v686 = vld [vmem:[%s305 + $0x10] sm:$0xff]
        %v687 = vld [vmem:[%s305 + $0x18] sm:$0xff]
        %v688 = vld [vmem:[%s305 + $0x20] sm:$0xff]
        %v689 = vld [vmem:[%s305 + $0x28] sm:$0xff]
        %v690 = vld [vmem:[%s305 + $0x30] sm:$0xff]
        %v691 = vld [vmem:[%s305 + $0x38] sm:$0xff]
        %v692 = vld [vmem:[%s305 + $0x40] sm:$0xff]
        %v693 = vld [vmem:[%s305 + $0x48] sm:$0xff]
        %v694 = vld [vmem:[%s305 + $0x50] sm:$0xff]
        %v695 = vld [vmem:[%s305 + $0x58] sm:$0xff]
        %v696 = vld [vmem:[%s305 + $0x60] sm:$0xff]
        %v697 = vld [vmem:[%s305 + $0x68] sm:$0xff]
        %v698 = vld [vmem:[%s305 + $0x70] sm:$0xff]
        %v699 = vld [vmem:[%s305 + $0x78] sm:$0xff]
        %v700 = vld [vmem:[%s305 + $0x80] sm:$0xff]
        %v701 = vld [vmem:[%s305 + $0x88] sm:$0xff]
        %v702 = vld [vmem:[%s305 + $0x90] sm:$0xff]
        %v703 = vld [vmem:[%s305 + $0x98] sm:$0xff]
        %v704 = vld [vmem:[%s305 + $0xa0] sm:$0xff]
        %v705 = vld [vmem:[%s305 + $0xa8] sm:$0xff]
        %v706 = vld [vmem:[%s305 + $0xb0] sm:$0xff]
        %v707 = vld [vmem:[%s305 + $0xb8] sm:$0xff]
        %v708 = vld [vmem:[%s305 + $0xc0] sm:$0xff]
        %v709 = vld [vmem:[%s305 + $0xc8] sm:$0xff]
        %v710 = vld [vmem:[%s305 + $0xd0] sm:$0xff]
        %v711 = vld [vmem:[%s305 + $0xd8] sm:$0xff]
        %v712 = vld [vmem:[%s305 + $0xe0] sm:$0xff]
        %v713 = vld [vmem:[%s305 + $0xe8] sm:$0xff]
        %v714 = vld [vmem:[%s305 + $0xf0] sm:$0xff]
        %v715 = vld [vmem:[%s305 + $0xf8] sm:$0xff]
        %716 = vmatprep.subr.mxu0 0.0
        %717 = vmatpush1.msra.mxu0 %v699
        %718 = vmatprep.subr.mxu0 0.0
        %719 = vmatpush1.msra.mxu0 %v698
        %720 = vmatprep.subr.mxu0 0.0
        %721 = vmatpush1.msra.mxu0 %v697
        %722 = vmatprep.subr.mxu0 0.0
        %723 = vmatpush1.msra.mxu0 %v696
        %724 = vmatprep.subr.mxu0 0.0
        %725 = vmatpush1.msra.mxu0 %v695
        %726 = vmatprep.subr.mxu0 0.0
        %727 = vmatpush1.msra.mxu0 %v694
        %728 = vmatprep.subr.mxu0 0.0
        %729 = vmatpush1.msra.mxu0 %v693
        %730 = vmatprep.subr.mxu0 0.0
        %731 = vmatpush1.msra.mxu0 %v692
        %732 = vmatprep.subr.mxu0 0.0
        %733 = vmatpush1.msra.mxu0 %v691
        %734 = vmatprep.subr.mxu0 0.0
        %735 = vmatpush1.msra.mxu0 %v690
        %736 = vmatprep.subr.mxu0 0.0
        %737 = vmatpush1.msra.mxu0 %v689
        %738 = vmatprep.subr.mxu0 0.0
        %739 = vmatpush1.msra.mxu0 %v688
        %740 = vmatprep.subr.mxu0 0.0
        %741 = vmatpush1.msra.mxu0 %v687
        %742 = vmatprep.subr.mxu0 0.0
        %743 = vmatpush1.msra.mxu0 %v686
        %744 = vmatprep.subr.mxu0 0.0
        %745 = vmatpush1.msra.mxu0 %v685
        %746 = vmatprep.subr.mxu0 0.0
        %747 = vmatpush1.msra.mxu0 %v684
        %748 = vmatprep.subr.mxu0 0.0
        %749 = vmatpush2.msra.mxu0 %v715
        %750 = vmatprep.subr.mxu0 0.0
        %751 = vmatpush2.msra.mxu0 %v714
        %752 = vmatprep.subr.mxu0 0.0
        %753 = vmatpush2.msra.mxu0 %v713
        %754 = vmatprep.subr.mxu0 0.0
        %755 = vmatpush2.msra.mxu0 %v712
        %756 = vmatprep.subr.mxu0 0.0
        %757 = vmatpush2.msra.mxu0 %v711
        %758 = vmatprep.subr.mxu0 0.0
        %759 = vmatpush2.msra.mxu0 %v710
        %760 = vmatprep.subr.mxu0 0.0
        %761 = vmatpush2.msra.mxu0 %v709
        %762 = vmatprep.subr.mxu0 0.0
        %763 = vmatpush2.msra.mxu0 %v708
        %764 = vmatprep.subr.mxu0 0.0
        %765 = vmatpush2.msra.mxu0 %v707
        %766 = vmatprep.subr.mxu0 0.0
        %767 = vmatpush2.msra.mxu0 %v706
        %768 = vmatprep.subr.mxu0 0.0
        %769 = vmatpush2.msra.mxu0 %v705
        %770 = vmatprep.subr.mxu0 0.0
        %771 = vmatpush2.msra.mxu0 %v704
        %772 = vmatprep.subr.mxu0 0.0
        %773 = vmatpush2.msra.mxu0 %v703
        %774 = vmatprep.subr.mxu0 0.0
        %775 = vmatpush2.msra.mxu0 %v702
        %776 = vmatprep.subr.mxu0 0.0
        %777 = vmatpush2.msra.mxu0 %v701
        %778 = vmatprep.subr.mxu0 0.0
        %779 = vmatpush2.msra.mxu0 %v700
        %780 = vmatprep.mubr.f32.mxu0 %v661
        %781 = vmatmul.mubr.f32.gmra.mxu0 %v660
        %v782 = vpop.f32.mrf.mxu0
        %v783 = vadd.f32 0.0, %v782
        %v784 = vpop.f32.mrf.mxu0
        %785 = vmatprep.mubr.f32.mxu0 %v663
        %786 = vmatmul.mubr.f32.gmra.mxu0 %v662
        %v787 = vpop.f32.mrf.mxu0
        %v788 = vadd.f32 0.0, %v787
        %v789 = vpop.f32.mrf.mxu0
        %790 = vmatprep.mubr.f32.mxu0 %v665
        %791 = vmatmul.mubr.f32.gmra.mxu0 %v664
        %v792 = vpop.f32.mrf.mxu0
        %v793 = vadd.f32 0.0, %v792
        %v794 = vpop.f32.mrf.mxu0
        %795 = vmatprep.mubr.f32.mxu0 %v667
        %796 = vmatmul.mubr.f32.gmra.mxu0 %v666
        %v797 = vpop.f32.mrf.mxu0
        %v798 = vadd.f32 0.0, %v797
        %v799 = vpop.f32.mrf.mxu0
        %800 = vmatprep.mubr.f32.mxu0 %v669
        %801 = vmatmul.mubr.f32.gmra.mxu0 %v668
        %v802 = vpop.f32.mrf.mxu0
        %v803 = vadd.f32 0.0, %v802
        %v804 = vpop.f32.mrf.mxu0
        %805 = vmatprep.mubr.f32.mxu0 %v671
        %806 = vmatmul.mubr.f32.gmra.mxu0 %v670
        %v807 = vpop.f32.mrf.mxu0
        %v808 = vadd.f32 0.0, %v807
        %v809 = vpop.f32.mrf.mxu0
        %810 = vmatprep.mubr.f32.mxu0 %v673
        %811 = vmatmul.mubr.f32.gmra.mxu0 %v672
        %v812 = vpop.f32.mrf.mxu0
        %v813 = vadd.f32 0.0, %v812
        %v814 = vpop.f32.mrf.mxu0
        %815 = vmatprep.mubr.f32.mxu0 %v675
        %816 = vmatmul.mubr.f32.gmra.mxu0 %v674
        %v817 = vpop.f32.mrf.mxu0
        %v818 = vadd.f32 0.0, %v817
        %v819 = vpop.f32.mrf.mxu0
        %820 = vdwg.mxu0
        %v821 = vadd.f32 %v676, %v783
        %v822 = vadd.f32 %v677, %v788
        %v823 = vadd.f32 %v678, %v793
        %v824 = vadd.f32 %v679, %v798
        %v825 = vadd.f32 %v680, %v803
        %v826 = vadd.f32 %v681, %v808
        %v827 = vadd.f32 %v682, %v813
        %v828 = vadd.f32 %v683, %v818
        %829 = vst [vmem:[#allocation2] sm:$0xff] %v821
        %830 = vst [vmem:[#allocation2 + $0x8] sm:$0xff] %v822
        %831 = vst [vmem:[#allocation2 + $0x10] sm:$0xff] %v823
        %832 = vst [vmem:[#allocation2 + $0x18] sm:$0xff] %v824
        %833 = vst [vmem:[#allocation2 + $0x20] sm:$0xff] %v825
        %834 = vst [vmem:[#allocation2 + $0x28] sm:$0xff] %v826
        %835 = vst [vmem:[#allocation2 + $0x30] sm:$0xff] %v827
        %836 = vst [vmem:[#allocation2 + $0x38] sm:$0xff] %v828
        %p837 = scmp.eq.s32.totalorder %s30, 1
        // Predicated region
        $region57: #{gpt_neox_mlp.1} parent=39 // pred_check
          %p838 = pneg %p837
        $region58: #{gpt_neox_mlp.1} parent=39 // pred_check_branch
          %840 = sbr.rel (%p838) target = $region60
        $region59: #{gpt_neox_mlp.1} parent=39 // pred_region
          %v841 = vld [vmem:[#allocation2] sm:$0xff]
          %v842 = vld [vmem:[#allocation2 + $0x8] sm:$0xff]
          %v843 = vld [vmem:[#allocation2 + $0x10] sm:$0xff]
          %v844 = vld [vmem:[#allocation2 + $0x18] sm:$0xff]
          %v845 = vld [vmem:[#allocation2 + $0x20] sm:$0xff]
          %v846 = vld [vmem:[#allocation2 + $0x28] sm:$0xff]
          %v847 = vld [vmem:[#allocation2 + $0x30] sm:$0xff]
          %v848 = vld [vmem:[#allocation2 + $0x38] sm:$0xff]
          %v849 = vld [vmem:[%s4] sm:$0x1]
          %v851 = vlaneseq
          %v852 = vshrl.u32 %v851, 7
          %v853 = vsub.s32 0, %v852
          %v854 = vrot.slane %v849, %v853
          %v856 = vadd.f32 %v841, %v854
          %v857 = vadd.f32 %v842, %v854
          %v858 = vadd.f32 %v843, %v854
          %v859 = vadd.f32 %v844, %v854
          %v860 = vadd.f32 %v845, %v854
          %v861 = vadd.f32 %v846, %v854
          %v862 = vadd.f32 %v847, %v854
          %v863 = vadd.f32 %v848, %v854
          %864 = vst [vmem:[%s345] sm:$0xff] %v856
          %865 = vst [vmem:[%s345 + $0x8] sm:$0xff] %v857
          %866 = vst [vmem:[%s345 + $0x10] sm:$0xff] %v858
          %867 = vst [vmem:[%s345 + $0x18] sm:$0xff] %v859
          %868 = vst [vmem:[%s345 + $0x20] sm:$0xff] %v860
          %869 = vst [vmem:[%s345 + $0x28] sm:$0xff] %v861
          %870 = vst [vmem:[%s345 + $0x30] sm:$0xff] %v862
          %871 = vst [vmem:[%s345 + $0x38] sm:$0xff] %v863
        $region60: #{gpt_neox_mlp.1} parent=39 // pred_fallthru
          _
        %s872 = sand.u32 %s170, 1
        %s873 = scalar_lea.sflag [#allocation5], %s872
        %s874 = sand.u32 %s170, 1
        %s875 = smul.addr %s874, 64
        %s876 = scalar_lea.vmem [#allocation9], %s875
        // Predicated region
        $region61: #{gpt_neox_mlp.1} parent=39 // pred_check
          %p877 = pneg %p180
        $region62: #{gpt_neox_mlp.1} parent=39 // pred_check_branch
          %879 = sbr.rel (%p877) target = $region64
        $region63: #{gpt_neox_mlp.1} parent=39 // pred_region
          %s880 = smul.u32 8, %s29
          %s882 = ssub.s32 1024, 1024
          %883 = vsyncadd %s873, %s882
          %s884 = smul.addr %s880, 128
          %s885 = scalar_lea.hbm %s5, %s884
          %s886 = sshll.u32 %s876, 4
          %s887 = int_to_ptr.vmem [resolvable:$true] %s886
          %892 = dma.vmem_to_hbm [thread:$0]  %s887, 1024, %s885, %s873, 128, 128, 8
        $region64: #{gpt_neox_mlp.1} parent=39 // pred_fallthru
          _
      $region40: #{gpt_neox_mlp.1} parent=5 // pred_fallthru
        _
      %p893 = scmp.le.s32.totalorder 2, %s20
      // Predicated region
      $region65: #{gpt_neox_mlp.1} parent=5 // pred_check
        %p894 = pneg %p893
      $region66: #{gpt_neox_mlp.1} parent=5 // pred_check_branch
        %896 = sbr.rel (%p894) target = $region68
      $region67: #{gpt_neox_mlp.1} parent=5 // pred_region
        %s897 = ssub.s32 %s20, 2
        // Predicated region
        $region69: #{gpt_neox_mlp.1} parent=67 // pred_check
          %p898 = pneg %p186
        $region70: #{gpt_neox_mlp.1} parent=67 // pred_check_branch
          %900 = sbr.rel (%p898) target = $region72
        $region71: #{gpt_neox_mlp.1} parent=67 // pred_region
          %s901 = sand.u32 %s171, 1
          %s902 = scalar_lea.sflag [#allocation5], %s901
          %s903 = sand.u32 %s171, 1
          %s904 = smul.addr %s903, 64
          %s905 = scalar_lea.vmem [#allocation9], %s904
          %906 = dma.done %s902, 1024
        $region72: #{gpt_neox_mlp.1} parent=67 // pred_fallthru
          _
      $region68: #{gpt_neox_mlp.1} parent=5 // pred_fallthru
        _
    $region6: #{gpt_neox_mlp.1} parent=1 // loop_footer
      %s24 = sadd.s32 1, %s20
    $region7: #{gpt_neox_mlp.1} parent=1 // loop_footer_branch
      %19 = sbr.rel target = $region3
    $region8: #{gpt_neox_mlp.1} parent=1 // loop_exit
      _
    %907 = vsyncpa [#allocation4], 1
    %s908 = scalar_lea.sflag [#allocation4], 1
    %909 = vsyncpa %s908, 1
    %910 = vsyncpa [#allocation7], 1
    %s911 = scalar_lea.sflag [#allocation7], 1
    %912 = vsyncpa %s911, 1
    %913 = vsyncpa [#allocation5], 1
    %s914 = scalar_lea.sflag [#allocation5], 1
    %915 = vsyncpa %s914, 1

</llo_original>
